<compile_context>
chip_gen: v6e
topology: v6e:2x2x1
jax: 0.10.0
libtpu: 0.0.40
codegen_flags: <defaults>
</compile_context>

<pallas_src>
import numpy as np
import jax
import jax.numpy as jnp
from jax.experimental import pallas as pl
from jax.experimental.pallas import tpu as pltpu


# ---------------------------------------------------------------------------
# Kernel
# ---------------------------------------------------------------------------
def _gcn_agg_kernel(mask_ref, emb_hi_ref, emb_lo_ref, out_ref, acc_ref, rowsum_ref):
    j = pl.program_id(1)
    k = pl.program_id(2)

    @pl.when(k == 0)
    def _():
        acc_ref[...] = jnp.zeros_like(acc_ref)

    @pl.when(jnp.logical_and(j == 0, k == 0))
    def _():
        rowsum_ref[...] = jnp.zeros_like(rowsum_ref)

    mask = mask_ref[...]                                   # bf16 {0,1}, exact

    # Row degree, accumulated in f32 (bf16 integer range tops out at 256).
    # Only at j == 0; any j > 0 D-tiles reuse the persistent scratch value.
    @pl.when(j == 0)
    def _():
        rowsum_ref[...] += jnp.sum(mask, axis=1, keepdims=True, dtype=jnp.float32)

    # Two bf16 MXU matmuls (hi + lo embed planes) with f32 accumulation:
    # ~f32-class accuracy at bf16 MXU throughput.
    acc_ref[...] += jnp.dot(mask, emb_hi_ref[...], preferred_element_type=jnp.float32)
    acc_ref[...] += jnp.dot(mask, emb_lo_ref[...], preferred_element_type=jnp.float32)

    @pl.when(k == pl.num_programs(2) - 1)
    def _():
        # (mask / sqrt(deg)) @ E == (mask @ E) * rsqrt(deg), applied on [tm, tn].
        # Real rows always include a self-loop (deg >= 1); zero-degree padded
        # rows produce NaN but are sliced off by the wrapper (same divide-by-
        # zero behavior as the PyTorch reference for truly empty rows).
        out_ref[...] = acc_ref[...] * jax.lax.rsqrt(rowsum_ref[...])


# ---------------------------------------------------------------------------
# Tile planning
# ---------------------------------------------------------------------------
def _round_up(x: int, m: int) -> int:
    return ((x + m - 1) // m) * m


def _vmem_capacity_bytes() -> int:
    try:
        cap = getattr(pltpu.get_tpu_info(), "vmem_capacity_bytes", None)
        if cap:
            return int(cap)
    except Exception:
        pass
    return 64 << 20  # v7x per-TC VMEM: safe lower bound on every generation


def plan_gcn_tiles(B: int, U: int, D: int, *, max_tm: int = 512) -> dict:
    """Pick per-generation tile sizes + padded shapes + vmem limit."""
    cap = _vmem_capacity_bytes()
    # Bigger K tiles on the 128 MiB VMEM chips (v5e/v6e); 2048 on v7x (64 MiB).
    max_tk = 4096 if cap >= (96 << 20) else 2048
    tile_budget = int(cap * 0.55)           # tiles + double-buffers must fit here

    Bp8 = _round_up(B, 8)
    Uc = _round_up(U, 128)
    Dc = _round_up(D, 128)

    tm = min(max_tm, Bp8)
    # v7x megacore: prefer >= 2 batch tiles when the batch is big enough so both
    # TensorCores get work on the only "parallel" axis.
    if Bp8 >= 512 and _round_up(B, tm) // tm < 2:
        tm = 256
    tk = min(max_tk, Uc)
    tn = Dc                                  # collapse D: mask streamed exactly once

    def footprint(tm, tk, tn):
        return (2 * tm * tk * 2              # mask tiles (bf16), double-buffered
                + 2 * 2 * tk * tn * 2        # embed hi+lo tiles (bf16)
                + 2 * tm * tn * 4            # output tiles (f32)
                + tm * tn * 4                # f32 accumulator scratch
                + tm * 128 * 4)              # row-sum scratch (lane-padded)

    # Shrink tk, then tm, then (last resort) re-tile D until we fit VMEM.
    while footprint(tm, tk, tn) > tile_budget:
        if tk > 128:
            tk = max(128, _round_up(tk // 2, 128))
        elif tm > 8:
            tm = max(8, _round_up(tm // 2, 8))
        elif tn > 128:
            tn = max(128, _round_up(tn // 2, 128))
        else:
            break

    Bp = _round_up(B, tm)
    Up = _round_up(U, tk)
    Dp = _round_up(D, tn)
    vmem_limit = min(max(int(1.3 * footprint(tm, tk, tn)), 32 << 20),
                     int(cap * 0.75))
    return dict(tm=tm, tk=tk, tn=tn, Bp=Bp, Up=Up, Dp=Dp, vmem_limit=vmem_limit)


# ---------------------------------------------------------------------------
# Wrapper
# ---------------------------------------------------------------------------
def gcn_aggregate(mask: jax.Array, embed_matrix: jax.Array,
                  *, rows: int | None = None, plan: dict | None = None) -> jax.Array:
    """GCN-style aggregation: (mask / sqrt(mask.sum(1))) @ embed_matrix.

    mask: [B, U] {0,1} membership matrix, or a pre-padded bf16 [Bp, Up] mask
          (preferred: skips extra HBM cast/pad passes over the dominant operand).
    embed_matrix: [U, D] float features of the unique neighbor nodes.
    rows: number of valid batch rows when `mask` is pre-padded.
    """
    U, D = embed_matrix.shape
    B = rows if rows is not None else mask.shape[0]
    if plan is None:
        plan = plan_gcn_tiles(B, U, D)
    tm, tk, tn = plan["tm"], plan["tk"], plan["tn"]
    Bp, Up, Dp = plan["Bp"], plan["Up"], plan["Dp"]

    # Mask: bf16 is exact for {0,1}. Zero padding is semantically inert (padded
    # U columns hit zero embed rows; padded B rows are sliced off below).
    if mask.shape == (Bp, Up):
        mask_p = mask.astype(jnp.bfloat16)          # no-op when already bf16
    else:
        assert mask.shape == (B, U), f"mask shape {mask.shape} != {(B, U)} / {(Bp, Up)}"
        mask_p = jnp.pad(mask.astype(jnp.bfloat16), ((0, Bp - B), (0, Up - U)))

    # Embed: hi/lo bf16 split so the MXU runs at bf16 rate with ~f32 accuracy.
    emb_p = jnp.pad(embed_matrix.astype(jnp.float32), ((0, Up - U), (0, Dp - D)))
    emb_hi = emb_p.astype(jnp.bfloat16)
    emb_lo = (emb_p - emb_hi.astype(jnp.float32)).astype(jnp.bfloat16)

    grid = (Bp // tm, Dp // tn, Up // tk)

    out_p = pl.pallas_call(
        _gcn_agg_kernel,
        out_shape=jax.ShapeDtypeStruct((Bp, Dp), jnp.float32),
        grid_spec=pltpu.PrefetchScalarGridSpec(
            num_scalar_prefetch=0,
            grid=grid,
            in_specs=[
                # Mask index_map ignores j, but with tn == Dp the j axis has a
                # single tile so the mask is streamed exactly once.
                # TODO(synk): if xprof shows exposed mask DMA, sweep
                # pipeline_mode=pl.Buffered(3) on this spec.
                pl.BlockSpec((tm, tk), lambda i, j, k: (i, k)),   # mask (bf16)
                pl.BlockSpec((tk, tn), lambda i, j, k: (k, j)),   # embed hi (bf16)
                pl.BlockSpec((tk, tn), lambda i, j, k: (k, j)),   # embed lo (bf16)
            ],
            out_specs=pl.BlockSpec((tm, tn), lambda i, j, k: (i, j)),
            scratch_shapes=[
                pltpu.VMEM((tm, tn), jnp.float32),   # matmul accumulator
                pltpu.VMEM((tm, 1), jnp.float32),    # row-sum accumulator
            ],
        ),
        compiler_params=pltpu.CompilerParams(
            # j carries the row-sum scratch across D tiles -> "arbitrary";
            # i (batch) stays "parallel" for v7x megacore sharding.
            dimension_semantics=("parallel", "arbitrary", "arbitrary"),
            vmem_limit_bytes=plan["vmem_limit"],
        ),
    )(mask_p, emb_hi, emb_lo)

    return out_p[:B, :D]


# ---------------------------------------------------------------------------
# Host-side preprocessing (mirrors the PyTorch forward's Python glue)
# ---------------------------------------------------------------------------
def build_samp_and_unique(nodes, to_neighs):
    samp_neighs = [set(neigh) | {int(nodes[i])} for i, neigh in enumerate(to_neighs)]
    unique_nodes_list = sorted(set.union(*samp_neighs))
    return samp_neighs, unique_nodes_list


def build_mask(samp_neighs, unique_nodes_list, shape, dtype):
    """Build the {0,1} membership mask directly at `shape` (may be pre-padded)."""
    idx = {n: i for i, n in enumerate(unique_nodes_list)}
    m = np.zeros(shape, dtype=np.float32)
    for r, neigh in enumerate(samp_neighs):
        for n in neigh:
            m[r, idx[n]] = 1.0
    return m.astype(dtype)   # host-side cast; bf16 is exact for {0,1}


if __name__ == "__main__":
    # Deterministic synthetic setup (small shapes).
    num_total_nodes = 20
    feat_dim = 32
    batch = 8

    key = jax.random.PRNGKey(0)
    feat_table = jax.random.normal(key, (num_total_nodes, feat_dim), dtype=jnp.float32)

    # "features" function == embedding-table lookup.
    def features(ids):
        return feat_table[jnp.asarray(ids, dtype=jnp.int32)]

    # Deterministic small graph: node i's neighbors are {i+1, i+2, 2*i} mod N.
    nodes = list(range(batch))
    to_neighs = [
        {(i + 1) % num_total_nodes, (i + 2) % num_total_nodes, (2 * i) % num_total_nodes}
        for i in nodes
    ]

    samp_neighs, unique_nodes_list = build_samp_and_unique(nodes, to_neighs)
    B, U, D = len(samp_neighs), len(unique_nodes_list), feat_dim

    # Plan tiles first so the mask can be built host-side already padded + bf16
    # (no extra device pad/cast pass over the dominant [B, U] operand).
    plan = plan_gcn_tiles(B, U, D)
    mask_np = build_mask(samp_neighs, unique_nodes_list,
                         (plan["Bp"], plan["Up"]), jnp.bfloat16)
    mask = jnp.asarray(mask_np)                         # [Bp, Up] bf16
    embed_matrix = features(unique_nodes_list)          # [U, D] f32

    out = gcn_aggregate(mask, embed_matrix, rows=B, plan=plan)
    out = jax.block_until_ready(out)

    # Pure-JAX reference (exact PyTorch semantics, f32).
    mask_f32 = jnp.asarray(mask_np[:B, :U].astype(np.float32))
    ref = (mask_f32 / jnp.sqrt(jnp.sum(mask_f32, axis=1, keepdims=True))) @ embed_matrix
    np.testing.assert_allclose(np.asarray(out), np.asarray(ref), rtol=1e-4, atol=1e-4)

    print("KERNEL_OK")
</pallas_src>

<mosaic_0001>
module attributes {stable_mosaic.version = 11 : i64} {
  func.func @_gcn_agg_kernel(%arg0: i32, %arg1: i32, %arg2: i32, %arg3: memref<8x128xbf16, #tpu.memory_space<vmem>>, %arg4: memref<128x128xbf16, #tpu.memory_space<vmem>>, %arg5: memref<128x128xbf16, #tpu.memory_space<vmem>>, %arg6: memref<8x128xf32, #tpu.memory_space<vmem>>, %arg7: memref<8x128xf32, #tpu.memory_space<vmem>>, %arg8: memref<8x1xf32, #tpu.memory_space<vmem>>) attributes {dimension_semantics = [#tpu.dimension_semantics<parallel>, #tpu.dimension_semantics<arbitrary>, #tpu.dimension_semantics<arbitrary>], iteration_bounds = array<i64: 1, 1, 1>, scalar_prefetch = 0 : i64, scratch_operands = 2 : i64, tpu.core_type = #tpu.core_type<tc>, window_params = [{transform_indices = @transform_0, window_bounds = array<i64: 8, 128>}, {transform_indices = @transform_1, window_bounds = array<i64: 128, 128>}, {transform_indices = @transform_2, window_bounds = array<i64: 128, 128>}, {transform_indices = @transform_3, window_bounds = array<i64: 8, 128>}]} {
    %c0_i32 = arith.constant 0 : i32
    %0 = arith.cmpi eq, %arg2, %c0_i32 : i32
    %1 = arith.extui %0 : i1 to i32
    %c0_i32_0 = arith.constant 0 : i32
    %2 = arith.cmpi ne, %1, %c0_i32_0 : i32
    scf.if %2 {
      %cst_22 = arith.constant 0.000000e+00 : f32
      %25 = vector.broadcast %cst_22 : f32 to vector<8x128xf32>
      %c0_23 = arith.constant 0 : index
      %c0_24 = arith.constant 0 : index
      %26 = vector.load %arg7[%c0_23, %c0_24] : memref<8x128xf32, #tpu.memory_space<vmem>>, vector<8x128xf32>
      tpu.vector_store %arg7[%c0_23, %c0_24], %25 {strides = array<i32>} : memref<8x128xf32, #tpu.memory_space<vmem>>, vector<8x128xf32>,
    } else {
    }
    %c0_i32_1 = arith.constant 0 : i32
    %3 = arith.cmpi eq, %arg1, %c0_i32_1 : i32
    %c0_i32_2 = arith.constant 0 : i32
    %4 = arith.cmpi eq, %arg2, %c0_i32_2 : i32
    %5 = arith.andi %3, %4 : i1
    %6 = arith.extui %5 : i1 to i32
    %c0_i32_3 = arith.constant 0 : i32
    %7 = arith.cmpi ne, %6, %c0_i32_3 : i32
    scf.if %7 {
      %cst_22 = arith.constant 0.000000e+00 : f32
      %25 = vector.broadcast %cst_22 : f32 to vector<8x1xf32>
      %c0_23 = arith.constant 0 : index
      %c0_24 = arith.constant 0 : index
      %26 = vector.load %arg8[%c0_23, %c0_24] : memref<8x1xf32, #tpu.memory_space<vmem>>, vector<8x1xf32>
      tpu.vector_store %arg8[%c0_23, %c0_24], %25 {strides = array<i32>} : memref<8x1xf32, #tpu.memory_space<vmem>>, vector<8x1xf32>,
    } else {
    }
    %c0 = arith.constant 0 : index
    %c0_4 = arith.constant 0 : index
    %8 = vector.load %arg3[%c0, %c0_4] : memref<8x128xbf16, #tpu.memory_space<vmem>>, vector<8x128xbf16>
    %c0_i32_5 = arith.constant 0 : i32
    %9 = arith.cmpi eq, %arg1, %c0_i32_5 : i32
    %10 = arith.extui %9 : i1 to i32
    %c0_i32_6 = arith.constant 0 : i32
    %11 = arith.cmpi ne, %10, %c0_i32_6 : i32
    scf.if %11 {
      %c0_22 = arith.constant 0 : index
      %c0_23 = arith.constant 0 : index
      %25 = vector.load %arg8[%c0_22, %c0_23] : memref<8x1xf32, #tpu.memory_space<vmem>>, vector<8x1xf32>
      %26 = arith.extf %8 : vector<8x128xbf16> to vector<8x128xf32>
      %cst_24 = arith.constant dense<0.000000e+00> : vector<8xf32>
      %27 = vector.multi_reduction <add>, %26, %cst_24 [1] : vector<8x128xf32> to vector<8xf32>
      %28 = vector.shape_cast %27 : vector<8xf32> to vector<8x1xf32>
      %29 = arith.addf %25, %28 : vector<8x1xf32>
      %c0_25 = arith.constant 0 : index
      %c0_26 = arith.constant 0 : index
      %30 = vector.load %arg8[%c0_25, %c0_26] : memref<8x1xf32, #tpu.memory_space<vmem>>, vector<8x1xf32>
      tpu.vector_store %arg8[%c0_25, %c0_26], %29 {strides = array<i32>} : memref<8x1xf32, #tpu.memory_space<vmem>>, vector<8x1xf32>,
    } else {
    }
    %c0_7 = arith.constant 0 : index
    %c0_8 = arith.constant 0 : index
    %12 = vector.load %arg7[%c0_7, %c0_8] : memref<8x128xf32, #tpu.memory_space<vmem>>, vector<8x128xf32>
    %c0_9 = arith.constant 0 : index
    %c0_10 = arith.constant 0 : index
    %13 = vector.load %arg4[%c0_9, %c0_10] : memref<128x128xbf16, #tpu.memory_space<vmem>>, vector<128x128xbf16>
    %cst = arith.constant dense<0.000000e+00> : vector<8x128xf32>
    %14 = tpu.matmul %8, %13, %cst {dimension_numbers = #tpu.dot_dimension_numbers<[1], [0], [0], [1], [0, 0, 1, 1], [], []>} : vector<8x128xbf16>, vector<128x128xbf16>, vector<8x128xf32> -> vector<8x128xf32>
    %15 = arith.addf %12, %14 : vector<8x128xf32>
    %c0_11 = arith.constant 0 : index
    %c0_12 = arith.constant 0 : index
    %16 = vector.load %arg7[%c0_11, %c0_12] : memref<8x128xf32, #tpu.memory_space<vmem>>, vector<8x128xf32>
    tpu.vector_store %arg7[%c0_11, %c0_12], %15 {strides = array<i32>} : memref<8x128xf32, #tpu.memory_space<vmem>>, vector<8x128xf32>,
    %c0_13 = arith.constant 0 : index
    %c0_14 = arith.constant 0 : index
    %17 = vector.load %arg7[%c0_13, %c0_14] : memref<8x128xf32, #tpu.memory_space<vmem>>, vector<8x128xf32>
    %c0_15 = arith.constant 0 : index
    %c0_16 = arith.constant 0 : index
    %18 = vector.load %arg5[%c0_15, %c0_16] : memref<128x128xbf16, #tpu.memory_space<vmem>>, vector<128x128xbf16>
    %cst_17 = arith.constant dense<0.000000e+00> : vector<8x128xf32>
    %19 = tpu.matmul %8, %18, %cst_17 {dimension_numbers = #tpu.dot_dimension_numbers<[1], [0], [0], [1], [0, 0, 1, 1], [], []>} : vector<8x128xbf16>, vector<128x128xbf16>, vector<8x128xf32> -> vector<8x128xf32>
    %20 = arith.addf %17, %19 : vector<8x128xf32>
    %c0_18 = arith.constant 0 : index
    %c0_19 = arith.constant 0 : index
    %21 = vector.load %arg7[%c0_18, %c0_19] : memref<8x128xf32, #tpu.memory_space<vmem>>, vector<8x128xf32>
    tpu.vector_store %arg7[%c0_18, %c0_19], %20 {strides = array<i32>} : memref<8x128xf32, #tpu.memory_space<vmem>>, vector<8x128xf32>,
    %c0_i32_20 = arith.constant 0 : i32
    %22 = arith.cmpi eq, %arg2, %c0_i32_20 : i32
    %23 = arith.extui %22 : i1 to i32
    %c0_i32_21 = arith.constant 0 : i32
    %24 = arith.cmpi ne, %23, %c0_i32_21 : i32
    scf.if %24 {
      %c0_22 = arith.constant 0 : index
      %c0_23 = arith.constant 0 : index
      %25 = vector.load %arg7[%c0_22, %c0_23] : memref<8x128xf32, #tpu.memory_space<vmem>>, vector<8x128xf32>
      %c0_24 = arith.constant 0 : index
      %c0_25 = arith.constant 0 : index
      %26 = vector.load %arg8[%c0_24, %c0_25] : memref<8x1xf32, #tpu.memory_space<vmem>>, vector<8x1xf32>
      %27 = math.rsqrt %26 : vector<8x1xf32>
      %28 = vector.broadcast %27 : vector<8x1xf32> to vector<8x128xf32>
      %29 = arith.mulf %25, %28 : vector<8x128xf32>
      %c0_26 = arith.constant 0 : index
      %c0_27 = arith.constant 0 : index
      %30 = vector.load %arg6[%c0_26, %c0_27] : memref<8x128xf32, #tpu.memory_space<vmem>>, vector<8x128xf32>
      tpu.vector_store %arg6[%c0_26, %c0_27], %29 {strides = array<i32>} : memref<8x128xf32, #tpu.memory_space<vmem>>, vector<8x128xf32>,
    } else {
    }
    return
  }
  func.func @transform_0(%arg0: i32, %arg1: i32, %arg2: i32) -> (i32, i32) {
    %c0_i32 = arith.constant 0 : i32
    return %arg0, %arg2 : i32, i32
  }
  func.func @transform_1(%arg0: i32, %arg1: i32, %arg2: i32) -> (i32, i32) {
    %c0_i32 = arith.constant 0 : i32
    return %arg2, %arg1 : i32, i32
  }
  func.func @transform_2(%arg0: i32, %arg1: i32, %arg2: i32) -> (i32, i32) {
    %c0_i32 = arith.constant 0 : i32
    return %arg2, %arg1 : i32, i32
  }
  func.func @transform_3(%arg0: i32, %arg1: i32, %arg2: i32) -> (i32, i32) {
    %c0_i32 = arith.constant 0 : i32
    return %arg0, %arg1 : i32, i32
  }
}

</mosaic_0001>

<llo_original>
// kernel: tpu_custom_call.1
$region0: #{tpu_custom_call.1}
  #allocation0 [shape = 'u32[]', space=smem, size = 0x4, offset = 0x4, fixed_abs, tag = 'smem constant byte address 0x4 - core index']
  #allocation1 [shape = 'u32[144,128]{1,0:T(1,128)}', space=vmem, size = 0x12000, scoped, tag = 'internal scratch']
  #allocation2 [shape = 'f32[8,128]{1,0:T(8,128)}', space=vmem, size = 0x1000, scoped, tag = 'scratch operand']
  #allocation3 [shape = 'f32[8,1]{1,0:T(8,128)}', space=vmem, size = 0x1000, scoped, tag = 'scratch operand']
  %s0 = inlined_call_operand.hbm [shape: bf16[8,128], index: 0, kind: input, shape index: {}]
  %s1 = inlined_call_operand.hbm [shape: bf16[128,128], index: 1, kind: input, shape index: {}]
  %s2 = inlined_call_operand.hbm [shape: bf16[128,128], index: 2, kind: input, shape index: {}]
  %s3 = inlined_call_operand.hbm [shape: f32[8,128], index: 3, kind: output, shape index: {}]
  %s4 = sld [smem:[#allocation0]]
  $region50: #{tpu_custom_call.1} parent=0
    _
  %s6 = ssub.s32 1, %s4
  %s7 = scalar_select 0, %s6, %s4
  $region1: #{tpu_custom_call.1} parent=0
    #allocation4 [shape = 'u8[2048]{0}', space=vmem, size = 0x800, scoped, tag = 'input window, operand 0, single buffered']
    #allocation5 [shape = 's32[1]{0}', space=sflag, size = 0x4, scoped, tag = 'scoped memory for tpu_custom_call.1']
    #allocation6 [shape = 's32[1]{0}', space=sflag, size = 0x4, scoped, tag = 'scoped memory for tpu_custom_call.1']
    #allocation7 [shape = 'u8[32768]{0}', space=vmem, size = 0x8000, scoped, tag = 'input window, operand 1, single buffered']
    #allocation8 [shape = 's32[1]{0}', space=sflag, size = 0x4, scoped, tag = 'scoped memory for tpu_custom_call.1']
    #allocation9 [shape = 'u8[32768]{0}', space=vmem, size = 0x8000, scoped, tag = 'input window, operand 2, single buffered']
    #allocation10 [shape = 'u8[4096]{0}', space=vmem, size = 0x1000, scoped, tag = 'output window, operand 0, single buffered']
    %8 = vsyncpa [#allocation5], 0
    %9 = vsyncpa [#allocation8], 0
    %10 = vsyncpa [#allocation6], 0
    // Predicated region
    $region2: #{tpu_custom_call.1} parent=1 // pred_check
      _
    $region3: #{tpu_custom_call.1} parent=1 // pred_check_branch
      %12 = sbr.rel (0) target = $region5
    $region4: #{tpu_custom_call.1} parent=1 // pred_region
      %s14 = ssub.s32 64, 64
      %15 = vsyncadd [#allocation5], %s14
      %s17 = sshll.u32 [#allocation4], 4
      %s18 = int_to_ptr.vmem [resolvable:$true] %s17
      %20 = dma.hbm_to_vmem [thread:$0]  %s0, 64, %s18, [#allocation5]
    $region5: #{tpu_custom_call.1} parent=1 // pred_fallthru
      _
    // Predicated region
    $region6: #{tpu_custom_call.1} parent=1 // pred_check
      _
    $region7: #{tpu_custom_call.1} parent=1 // pred_check_branch
      %22 = sbr.rel (0) target = $region9
    $region8: #{tpu_custom_call.1} parent=1 // pred_region
      %s24 = ssub.s32 1024, 1024
      %25 = vsyncadd [#allocation8], %s24
      %s26 = sshll.u32 [#allocation7], 4
      %s27 = int_to_ptr.vmem [resolvable:$true] %s26
      %32 = dma.hbm_to_vmem [thread:$0]  %s1, 1024, %s27, [#allocation8], 64, 64, 4
    $region9: #{tpu_custom_call.1} parent=1 // pred_fallthru
      _
    // Predicated region
    $region10: #{tpu_custom_call.1} parent=1 // pred_check
      _
    $region11: #{tpu_custom_call.1} parent=1 // pred_check_branch
      %34 = sbr.rel (0) target = $region13
    $region12: #{tpu_custom_call.1} parent=1 // pred_region
      %s36 = ssub.s32 1024, 1024
      %37 = vsyncadd [#allocation8], %s36
      %s38 = sshll.u32 [#allocation9], 4
      %s39 = int_to_ptr.vmem [resolvable:$true] %s38
      %44 = dma.hbm_to_vmem [thread:$0]  %s2, 1024, %s39, [#allocation8], 64, 64, 4
    $region13: #{tpu_custom_call.1} parent=1 // pred_fallthru
      _
    // Predicated region
    $region14: #{tpu_custom_call.1} parent=1 // pred_check
      _
    $region15: #{tpu_custom_call.1} parent=1 // pred_check_branch
      %46 = sbr.rel (0) target = $region17
    $region16: #{tpu_custom_call.1} parent=1 // pred_region
      %47 = dma.done [#allocation5], 64
    $region17: #{tpu_custom_call.1} parent=1 // pred_fallthru
      _
    // Predicated region
    $region18: #{tpu_custom_call.1} parent=1 // pred_check
      _
    $region19: #{tpu_custom_call.1} parent=1 // pred_check_branch
      %49 = sbr.rel (0) target = $region21
    $region20: #{tpu_custom_call.1} parent=1 // pred_region
      %50 = dma.done [#allocation8], 1024
    $region21: #{tpu_custom_call.1} parent=1 // pred_fallthru
      _
    // Predicated region
    $region22: #{tpu_custom_call.1} parent=1 // pred_check
      _
    $region23: #{tpu_custom_call.1} parent=1 // pred_check_branch
      %52 = sbr.rel (0) target = $region25
    $region24: #{tpu_custom_call.1} parent=1 // pred_region
      %53 = dma.done [#allocation8], 1024
    $region25: #{tpu_custom_call.1} parent=1 // pred_fallthru
      _
    %p55 = scmp.eq.s32.totalorder 0, 0
    // Predicated region
    $region26: #{tpu_custom_call.1} parent=1 // pred_check
      %p56 = pneg %p55
    $region27: #{tpu_custom_call.1} parent=1 // pred_check_branch
      %58 = sbr.rel (%p56) target = $region29
    $region28: #{tpu_custom_call.1} parent=1 // pred_region
      %59 = vst [vmem:[#allocation2] sm:$0xff] 0.0
    $region29: #{tpu_custom_call.1} parent=1 // pred_fallthru
      _
    %p60 = scmp.eq.s32.totalorder 0, 0
    %p61 = pnand %p60, %p55
    %p62 = pneg %p61
    // Predicated region
    $region30: #{tpu_custom_call.1} parent=1 // pred_check
      _
    $region31: #{tpu_custom_call.1} parent=1 // pred_check_branch
      %64 = sbr.rel (%p61) target = $region33
    $region32: #{tpu_custom_call.1} parent=1 // pred_region
      %vm65 = vcmask 7168
      %66 = vst.msk [vmem:[#allocation3] sm:$0xff] %vm65, 0.0
    $region33: #{tpu_custom_call.1} parent=1 // pred_fallthru
      _
    %v67 = vld [vmem:[#allocation4] sm:$0xf]
    // Predicated region
    $region34: #{tpu_custom_call.1} parent=1 // pred_check
      %p68 = pneg %p60
    $region35: #{tpu_custom_call.1} parent=1 // pred_check_branch
      %70 = sbr.rel (%p68) target = $region37
    $region36: #{tpu_custom_call.1} parent=1 // pred_region
      %v71 = vld [vmem:[#allocation3] sm:$0xff]
      %v72 = vunpack.c.l.bf16 %v67
      %73 = vadd.xlane.f32.xlu0 %v72
      %v74 = vpop.xlane.xlu0 %73
      %v75 = vadd.f32 %v71, %v74
      %vm76 = vcmask 7168
      %77 = vst.msk [vmem:[#allocation3] sm:$0xff] %vm76, %v75
    $region37: #{tpu_custom_call.1} parent=1 // pred_fallthru
      _
    %v78 = vld [vmem:[#allocation2] sm:$0xff]
    %v79 = vld [vmem:[#allocation7] sm:$0xf]
    %v80 = vld [vmem:[#allocation7 + $0x4] sm:$0xf]
    %v81 = vld [vmem:[#allocation7 + $0x8] sm:$0xf]
    %v82 = vld [vmem:[#allocation7 + $0xc] sm:$0xf]
    %v83 = vld [vmem:[#allocation7 + $0x10] sm:$0xf]
    %v84 = vld [vmem:[#allocation7 + $0x14] sm:$0xf]
    %v85 = vld [vmem:[#allocation7 + $0x18] sm:$0xf]
    %v86 = vld [vmem:[#allocation7 + $0x1c] sm:$0xf]
    %v87 = vld [vmem:[#allocation7 + $0x20] sm:$0xf]
    %v88 = vld [vmem:[#allocation7 + $0x24] sm:$0xf]
    %v89 = vld [vmem:[#allocation7 + $0x28] sm:$0xf]
    %v90 = vld [vmem:[#allocation7 + $0x2c] sm:$0xf]
    %v91 = vld [vmem:[#allocation7 + $0x30] sm:$0xf]
    %v92 = vld [vmem:[#allocation7 + $0x34] sm:$0xf]
    %v93 = vld [vmem:[#allocation7 + $0x38] sm:$0xf]
    %v94 = vld [vmem:[#allocation7 + $0x3c] sm:$0xf]
    %v111 = vunpack.c.l.b16 %v79
    %v112 = vunpack.c.l.b16 %v80
    %v113 = vunpack.c.l.b16 %v81
    %v114 = vunpack.c.l.b16 %v82
    %v115 = vunpack.c.l.b16 %v83
    %v116 = vunpack.c.l.b16 %v84
    %v117 = vunpack.c.l.b16 %v85
    %v118 = vunpack.c.l.b16 %v86
    %v119 = vunpack.c.l.b16 %v87
    %v120 = vunpack.c.l.b16 %v88
    %v121 = vunpack.c.l.b16 %v89
    %v122 = vunpack.c.l.b16 %v90
    %v123 = vunpack.c.l.b16 %v91
    %v124 = vunpack.c.l.b16 %v92
    %v125 = vunpack.c.l.b16 %v93
    %v126 = vunpack.c.l.b16 %v94
    %v127 = vpack.c.b16 %v112, %v111
    %v128 = vpack.c.b16 %v114, %v113
    %v129 = vpack.c.b16 %v116, %v115
    %v130 = vpack.c.b16 %v118, %v117
    %v131 = vpack.c.b16 %v120, %v119
    %v132 = vpack.c.b16 %v122, %v121
    %v133 = vpack.c.b16 %v124, %v123
    %v134 = vpack.c.b16 %v126, %v125
    %143 = vmatprep.subr.bf16.mxu0 0
    %144 = vmatpush1.bf16.msra.mxu0 %v134
    %145 = vmatprep.subr.bf16.mxu0 0
    %146 = vmatpush1.bf16.msra.mxu0 %v133
    %147 = vmatprep.subr.bf16.mxu0 0
    %148 = vmatpush1.bf16.msra.mxu0 %v132
    %149 = vmatprep.subr.bf16.mxu0 0
    %150 = vmatpush1.bf16.msra.mxu0 %v131
    %151 = vmatprep.subr.bf16.mxu0 0
    %152 = vmatpush1.bf16.msra.mxu0 %v130
    %153 = vmatprep.subr.bf16.mxu0 0
    %154 = vmatpush1.bf16.msra.mxu0 %v129
    %155 = vmatprep.subr.bf16.mxu0 0
    %156 = vmatpush1.bf16.msra.mxu0 %v128
    %157 = vmatprep.subr.bf16.mxu0 0
    %158 = vmatpush1.bf16.msra.mxu0 %v127
    %159 = vmatprep.subr.bf16.mxu0 0
    %160 = vmatpush2.bf16.msra.mxu0 0
    %161 = vmatprep.subr.bf16.mxu0 0
    %162 = vmatpush2.bf16.msra.mxu0 0
    %163 = vmatprep.subr.bf16.mxu0 0
    %164 = vmatpush2.bf16.msra.mxu0 0
    %165 = vmatprep.subr.bf16.mxu0 0
    %166 = vmatpush2.bf16.msra.mxu0 0
    %167 = vmatprep.subr.bf16.mxu0 0
    %168 = vmatpush2.bf16.msra.mxu0 0
    %169 = vmatprep.subr.bf16.mxu0 0
    %170 = vmatpush2.bf16.msra.mxu0 0
    %171 = vmatprep.subr.bf16.mxu0 0
    %172 = vmatpush2.bf16.msra.mxu0 0
    %173 = vmatprep.subr.bf16.mxu0 0
    %174 = vmatpush2.bf16.msra.mxu0 0
    %175 = vmatprep.mubr.bf16.mxu0 0
    %176 = vmatmul.mubr.bf16.gmra.mxu0 %v67
    %v177 = vpop.f32.mrf.mxu0
    %v178 = vadd.f32 0.0, %v177
    %v179 = vpop.f32.mrf.mxu0
    %v180 = vpop.f32.mrf.mxu0
    %v181 = vpop.f32.mrf.mxu0
    %182 = vdwg.mxu0
    %v183 = vadd.f32 %v78, %v178
    %184 = vst [vmem:[#allocation2] sm:$0xff] %v183
    %v185 = vld [vmem:[#allocation2] sm:$0xff]
    %v186 = vld [vmem:[#allocation9] sm:$0xf]
    %v187 = vld [vmem:[#allocation9 + $0x4] sm:$0xf]
    %v188 = vld [vmem:[#allocation9 + $0x8] sm:$0xf]
    %v189 = vld [vmem:[#allocation9 + $0xc] sm:$0xf]
    %v190 = vld [vmem:[#allocation9 + $0x10] sm:$0xf]
    %v191 = vld [vmem:[#allocation9 + $0x14] sm:$0xf]
    %v192 = vld [vmem:[#allocation9 + $0x18] sm:$0xf]
    %v193 = vld [vmem:[#allocation9 + $0x1c] sm:$0xf]
    %v194 = vld [vmem:[#allocation9 + $0x20] sm:$0xf]
    %v195 = vld [vmem:[#allocation9 + $0x24] sm:$0xf]
    %v196 = vld [vmem:[#allocation9 + $0x28] sm:$0xf]
    %v197 = vld [vmem:[#allocation9 + $0x2c] sm:$0xf]
    %v198 = vld [vmem:[#allocation9 + $0x30] sm:$0xf]
    %v199 = vld [vmem:[#allocation9 + $0x34] sm:$0xf]
    %v200 = vld [vmem:[#allocation9 + $0x38] sm:$0xf]
    %v201 = vld [vmem:[#allocation9 + $0x3c] sm:$0xf]
    %v218 = vunpack.c.l.b16 %v186
    %v219 = vunpack.c.l.b16 %v187
    %v220 = vunpack.c.l.b16 %v188
    %v221 = vunpack.c.l.b16 %v189
    %v222 = vunpack.c.l.b16 %v190
    %v223 = vunpack.c.l.b16 %v191
    %v224 = vunpack.c.l.b16 %v192
    %v225 = vunpack.c.l.b16 %v193
    %v226 = vunpack.c.l.b16 %v194
    %v227 = vunpack.c.l.b16 %v195
    %v228 = vunpack.c.l.b16 %v196
    %v229 = vunpack.c.l.b16 %v197
    %v230 = vunpack.c.l.b16 %v198
    %v231 = vunpack.c.l.b16 %v199
    %v232 = vunpack.c.l.b16 %v200
    %v233 = vunpack.c.l.b16 %v201
    %v234 = vpack.c.b16 %v219, %v218
    %v235 = vpack.c.b16 %v221, %v220
    %v236 = vpack.c.b16 %v223, %v222
    %v237 = vpack.c.b16 %v225, %v224
    %v238 = vpack.c.b16 %v227, %v226
    %v239 = vpack.c.b16 %v229, %v228
    %v240 = vpack.c.b16 %v231, %v230
    %v241 = vpack.c.b16 %v233, %v232
    %250 = vmatprep.subr.bf16.mxu0 0
    %251 = vmatpush1.bf16.msra.mxu0 %v241
    %252 = vmatprep.subr.bf16.mxu0 0
    %253 = vmatpush1.bf16.msra.mxu0 %v240
    %254 = vmatprep.subr.bf16.mxu0 0
    %255 = vmatpush1.bf16.msra.mxu0 %v239
    %256 = vmatprep.subr.bf16.mxu0 0
    %257 = vmatpush1.bf16.msra.mxu0 %v238
    %258 = vmatprep.subr.bf16.mxu0 0
    %259 = vmatpush1.bf16.msra.mxu0 %v237
    %260 = vmatprep.subr.bf16.mxu0 0
    %261 = vmatpush1.bf16.msra.mxu0 %v236
    %262 = vmatprep.subr.bf16.mxu0 0
    %263 = vmatpush1.bf16.msra.mxu0 %v235
    %264 = vmatprep.subr.bf16.mxu0 0
    %265 = vmatpush1.bf16.msra.mxu0 %v234
    %266 = vmatprep.subr.bf16.mxu0 0
    %267 = vmatpush2.bf16.msra.mxu0 0
    %268 = vmatprep.subr.bf16.mxu0 0
    %269 = vmatpush2.bf16.msra.mxu0 0
    %270 = vmatprep.subr.bf16.mxu0 0
    %271 = vmatpush2.bf16.msra.mxu0 0
    %272 = vmatprep.subr.bf16.mxu0 0
    %273 = vmatpush2.bf16.msra.mxu0 0
    %274 = vmatprep.subr.bf16.mxu0 0
    %275 = vmatpush2.bf16.msra.mxu0 0
    %276 = vmatprep.subr.bf16.mxu0 0
    %277 = vmatpush2.bf16.msra.mxu0 0
    %278 = vmatprep.subr.bf16.mxu0 0
    %279 = vmatpush2.bf16.msra.mxu0 0
    %280 = vmatprep.subr.bf16.mxu0 0
    %281 = vmatpush2.bf16.msra.mxu0 0
    %282 = vmatprep.mubr.bf16.mxu0 0
    %283 = vmatmul.mubr.bf16.gmra.mxu0 %v67
    %v284 = vpop.f32.mrf.mxu0
    %v285 = vadd.f32 0.0, %v284
    %v286 = vpop.f32.mrf.mxu0
    %v287 = vpop.f32.mrf.mxu0
    %v288 = vpop.f32.mrf.mxu0
    %289 = vdwg.mxu0
    %v290 = vadd.f32 %v185, %v285
    %291 = vst [vmem:[#allocation2] sm:$0xff] %v290
    // Predicated region
    $region38: #{tpu_custom_call.1} parent=1 // pred_check
      %p292 = pneg %p55
    $region39: #{tpu_custom_call.1} parent=1 // pred_check_branch
      %294 = sbr.rel (%p292) target = $region41
    $region40: #{tpu_custom_call.1} parent=1 // pred_region
      %v295 = vld [vmem:[#allocation2] sm:$0xff]
      %v296 = vld [vmem:[#allocation3] sm:$0xff]
      %v297 = vrsqrt.pop %v296
      %299 = vset.pattern.permute.xlu0 0
      %300 = vperm.xlu0 %299, %v297
      %v301 = vpop.permute.xlu0 %300
      %v303 = vmul.f32 %v295, %v301
      %304 = vst [vmem:[#allocation10] sm:$0xff] %v303
    $region41: #{tpu_custom_call.1} parent=1 // pred_fallthru
      _
    // Predicated region
    $region42: #{tpu_custom_call.1} parent=1 // pred_check
      _
    $region43: #{tpu_custom_call.1} parent=1 // pred_check_branch
      %306 = sbr.rel (0) target = $region45
    $region44: #{tpu_custom_call.1} parent=1 // pred_region
      %s308 = ssub.s32 128, 128
      %309 = vsyncadd [#allocation6], %s308
      %s311 = sshll.u32 [#allocation10], 4
      %s312 = int_to_ptr.vmem [resolvable:$true] %s311
      %314 = dma.vmem_to_hbm [thread:$0]  %s312, 128, %s3, [#allocation6]
    $region45: #{tpu_custom_call.1} parent=1 // pred_fallthru
      _
    // Predicated region
    $region46: #{tpu_custom_call.1} parent=1 // pred_check
      _
    $region47: #{tpu_custom_call.1} parent=1 // pred_check_branch
      %316 = sbr.rel (0) target = $region49
    $region48: #{tpu_custom_call.1} parent=1 // pred_region
      %317 = dma.done [#allocation6], 128
    $region49: #{tpu_custom_call.1} parent=1 // pred_fallthru
      _
    %318 = vsyncpa [#allocation5], 1
    %319 = vsyncpa [#allocation8], 1
    %320 = vsyncpa [#allocation6], 1

</llo_original>
